<compile_context>
chip_gen: v6e
topology: v6e:2x2x1
jax: 0.10.0
libtpu: 0.0.40
codegen_flags: <defaults>
</compile_context>

<pallas_src>
import functools

import jax
import jax.numpy as jnp
from jax.experimental import pallas as pl
from jax.experimental.pallas import tpu as pltpu

LANE = 128      # TPU lane width (last dim)
SUBLANE = 8     # sublane width (second-to-last dim)


def _round_up(n, m):
    return ((n + m - 1) // m) * m


def residual_block_kernel(x_ref, ctx_ref,
                          w0_ref, b0_ref,
                          w1_ref, b1_ref,
                          wc_ref, bc_ref,
                          o_ref):
    """One (TB, Fp) batch tile. Weights/biases are VMEM-resident across the grid."""
    x = x_ref[...].astype(jnp.float32)                                # (TB, Fp)

    # activation -> linear0   (bf16 MXU operands, f32 accumulation)
    t = jnp.maximum(x, 0.0).astype(w0_ref.dtype)
    t = jnp.dot(t, w0_ref[...], preferred_element_type=jnp.float32) + b0_ref[...]

    # activation -> dropout(p=0 == identity) -> linear1
    # TODO(synk): dropout_probability > 0 would need pltpu.prng_seed / prng_random_bits.
    t = jnp.maximum(t, 0.0).astype(w1_ref.dtype)
    t = jnp.dot(t, w1_ref[...], preferred_element_type=jnp.float32) + b1_ref[...]

    # context projection + GLU gate:  glu(cat([t, c], 1), 1) == t * sigmoid(c)
    c = jnp.dot(ctx_ref[...].astype(wc_ref.dtype), wc_ref[...],
                preferred_element_type=jnp.float32) + bc_ref[...]
    gate = jax.nn.sigmoid(c)                                          # EUP slot

    o_ref[...] = (x + t * gate).astype(o_ref.dtype)


def prepare_params(params, matmul_dtype=jnp.bfloat16):
    """One-time prep (do OUTSIDE the hot loop): transpose to (in, out), zero-pad the
    output/feature dims to lane multiples, cast weights to the MXU dtype.
    The context K-dim is NOT padded (passed at its natural size)."""
    w0, b0, w1, b1, wc, bc = params
    features = w0.shape[0]
    context_features = wc.shape[1]
    Fp = _round_up(features, LANE)

    def pad_w(w_t, rows, cols):           # w_t is (in, out)
        out = jnp.zeros((rows, cols), matmul_dtype)
        return out.at[:w_t.shape[0], :w_t.shape[1]].set(w_t.astype(matmul_dtype))

    def pad_b(b, cols):                   # bias kept f32: added to the f32 accumulator
        out = jnp.zeros((1, cols), jnp.float32)
        return out.at[0, :b.shape[0]].set(b.astype(jnp.float32))

    return (pad_w(w0.T, Fp, Fp), pad_b(b0, Fp),
            pad_w(w1.T, Fp, Fp), pad_b(b1, Fp),
            pad_w(wc.T, context_features, Fp), pad_b(bc, Fp))


def _resident_spec(shape):
    """Constant-index (VMEM-resident) operand; request single buffering."""
    zero = lambda i: (0,) * len(shape)
    try:
        return pl.BlockSpec(shape, zero, pipeline_mode=pl.Buffered(1))
    except Exception:      # older jax without pipeline_mode kwarg
        return pl.BlockSpec(shape, zero)


@functools.partial(jax.jit, static_argnames=("block_b",))
def residual_block(x, context, prepared, block_b=2048):
    """x: (B, F), context: (B, C) (f32 or bf16), prepared: output of prepare_params."""
    w0p, b0p, w1p, b1p, wcp, bcp = prepared
    B, F = x.shape
    _, C = context.shape
    Fp = w0p.shape[0]

    # Feature pad only when F is not lane-aligned; zero padding keeps padded lanes
    # exactly zero through the whole block (relu(0)=0, zero weight rows/cols,
    # t_pad * sigmoid(0 + 0) = 0), so out_pad = 0.  No batch padding: pl.cdiv grid,
    # Pallas masks the ragged last tile's writes.
    x_in = x if Fp == F else jnp.pad(x, ((0, 0), (0, Fp - F)))

    x_bytes = x_in.dtype.itemsize
    c_bytes = context.dtype.itemsize
    o_bytes = x.dtype.itemsize
    w_bytes = w0p.dtype.itemsize
    b_bytes = b0p.dtype.itemsize
    weight_bytes = ((w0p.size + w1p.size + wcp.size) * w_bytes
                    + (b0p.size + b1p.size + bcp.size) * b_bytes)

    # Generation-aware VMEM budget (~75% of per-core capacity, headroom for Mosaic scratch).
    try:
        vmem_cap = int(pltpu.get_tpu_info().vmem_capacity_bytes)
    except Exception:
        vmem_cap = 64 << 20          # conservative (v7x per-TC) fallback
    budget = int(0.75 * vmem_cap)

    def vmem_need(tb):
        # resident weights (single-buffered) + double-buffered x / ctx / out tiles
        act = 2 * tb * (Fp * x_bytes + C * c_bytes + Fp * o_bytes)
        return weight_bytes + act

    if vmem_need(SUBLANE) > budget:
        # TODO(synk): feature-tiled (second grid axis over N, K-tiled W0) fallback for
        # very large F on v7x's 64 MiB/TC instead of requiring fully resident weights.
        raise NotImplementedError(
            f"Resident-weight ResidualBlock needs {vmem_need(SUBLANE)} B of VMEM "
            f"but only {budget} B are available on this chip.")

    # Batch tile: as large as fits (one grid step when possible), multiple of 8
    # sublanes unless it equals the full (possibly ragged) batch.
    TB = min(block_b, _round_up(B, SUBLANE))
    if TB > B:
        TB = B
    while vmem_need(TB) > budget and TB > SUBLANE:
        TB = _round_up(max(SUBLANE, TB // 2), SUBLANE)

    grid = (pl.cdiv(B, TB),)
    vmem_limit = int(min(budget, max(4 << 20, round(1.25 * vmem_need(TB)))))

    cost = pl.CostEstimate(
        flops=2 * B * Fp * (2 * Fp + C),
        transcendentals=B * Fp,
        bytes_accessed=int(B * (Fp * x_bytes + C * c_bytes + Fp * o_bytes) + weight_bytes),
    )

    xo_spec = pl.BlockSpec((TB, Fp), lambda i: (i, 0))       # streamed per grid step
    ctx_spec = pl.BlockSpec((TB, C), lambda i: (i, 0))       # unpadded C (full-dim block)

    out = pl.pallas_call(
        residual_block_kernel,
        out_shape=jax.ShapeDtypeStruct((B, Fp), x.dtype),
        grid=grid,
        in_specs=[xo_spec, ctx_spec,
                  _resident_spec((Fp, Fp)), _resident_spec((1, Fp)),
                  _resident_spec((Fp, Fp)), _resident_spec((1, Fp)),
                  _resident_spec((C, Fp)), _resident_spec((1, Fp))],
        out_specs=xo_spec,
        compiler_params=pltpu.CompilerParams(
            dimension_semantics=("parallel",),               # megacore split on v7x
            vmem_limit_bytes=vmem_limit,
        ),
        cost_estimate=cost,
        # NOTE: callers that no longer need x can add input_output_aliases={0: 0}.
    )(x_in, context, w0p, b0p, w1p, b1p, wcp, bcp)

    return out if Fp == F else out[:, :F]


def init_params(key, features, context_features):
    """Deterministic init mimicking nn.Linear defaults + zero_initialization."""
    k0w, k0b, kcw, kcb, k1w, k1b = jax.random.split(key, 6)
    lim_f = 1.0 / jnp.sqrt(features)
    lim_c = 1.0 / jnp.sqrt(context_features)
    w0 = jax.random.uniform(k0w, (features, features), jnp.float32, -lim_f, lim_f)
    b0 = jax.random.uniform(k0b, (features,), jnp.float32, -lim_f, lim_f)
    # last linear layer: init.uniform_(-0.001, 0.001)
    w1 = jax.random.uniform(k1w, (features, features), jnp.float32, -0.001, 0.001)
    b1 = jax.random.uniform(k1b, (features,), jnp.float32, -0.001, 0.001)
    wc = jax.random.uniform(kcw, (features, context_features), jnp.float32, -lim_c, lim_c)
    bc = jax.random.uniform(kcb, (features,), jnp.float32, -lim_c, lim_c)
    return (w0, b0, w1, b1, wc, bc)


def residual_block_ref(x, context, params):
    """Pure-JAX f32 reference matching the PyTorch forward."""
    w0, b0, w1, b1, wc, bc = params
    t = jax.nn.relu(x)
    t = t @ w0.T + b0
    t = jax.nn.relu(t)
    t = t @ w1.T + b1
    c = context @ wc.T + bc
    t = t * jax.nn.sigmoid(c)          # glu(cat([t, c], 1), 1)
    return x + t


if __name__ == "__main__":
    B, FEATURES, CTX = 8, 32, 16

    key = jax.random.PRNGKey(0)
    kx, kc, kp = jax.random.split(key, 3)
    x = jax.random.normal(kx, (B, FEATURES), jnp.float32)
    context = jax.random.normal(kc, (B, CTX), jnp.float32)
    params = init_params(kp, FEATURES, CTX)

    prepared = prepare_params(params)          # one-time: transpose + pad + bf16 cast
    out = residual_block(x, context, prepared)
    out = jax.block_until_ready(out)

    ref = residual_block_ref(x, context, params)
    assert out.shape == (B, FEATURES)
    # bf16 matmul operands (f32 accumulate) => slightly looser tolerance than pure f32.
    assert jnp.allclose(out, ref, atol=5e-3, rtol=5e-3), "mismatch vs reference"

    print("KERNEL_OK")
</pallas_src>

<mosaic_0001>
module attributes {stable_mosaic.version = 11 : i64} {
  func.func @residual_block_kernel(%arg0: i32, %arg1: memref<8x128xf32, #tpu.memory_space<vmem>>, %arg2: memref<8x16xf32, #tpu.memory_space<vmem>>, %arg3: memref<128x128xbf16, #tpu.memory_space<vmem>>, %arg4: memref<1x128xf32, #tpu.memory_space<vmem>>, %arg5: memref<128x128xbf16, #tpu.memory_space<vmem>>, %arg6: memref<1x128xf32, #tpu.memory_space<vmem>>, %arg7: memref<16x128xbf16, #tpu.memory_space<vmem>>, %arg8: memref<1x128xf32, #tpu.memory_space<vmem>>, %arg9: memref<8x128xf32, #tpu.memory_space<vmem>>) attributes {dimension_semantics = [#tpu.dimension_semantics<parallel>], iteration_bounds = array<i64: 1>, scalar_prefetch = 0 : i64, scratch_operands = 0 : i64, tpu.core_type = #tpu.core_type<tc>, window_params = [{transform_indices = @transform_0, window_bounds = array<i64: 8, 128>}, {transform_indices = @transform_1, window_bounds = array<i64: 8, 16>}, {pipeline_mode = #tpu.pipeline_mode<synchronous>, transform_indices = @transform_2, window_bounds = array<i64: 128, 128>}, {pipeline_mode = #tpu.pipeline_mode<synchronous>, transform_indices = @transform_3, window_bounds = array<i64: 1, 128>}, {pipeline_mode = #tpu.pipeline_mode<synchronous>, transform_indices = @transform_4, window_bounds = array<i64: 128, 128>}, {pipeline_mode = #tpu.pipeline_mode<synchronous>, transform_indices = @transform_5, window_bounds = array<i64: 1, 128>}, {pipeline_mode = #tpu.pipeline_mode<synchronous>, transform_indices = @transform_6, window_bounds = array<i64: 16, 128>}, {pipeline_mode = #tpu.pipeline_mode<synchronous>, transform_indices = @transform_7, window_bounds = array<i64: 1, 128>}, {transform_indices = @transform_8, window_bounds = array<i64: 8, 128>}]} {
    %c0 = arith.constant 0 : index
    %c0_0 = arith.constant 0 : index
    %0 = vector.load %arg1[%c0, %c0_0] : memref<8x128xf32, #tpu.memory_space<vmem>>, vector<8x128xf32>
    %cst = arith.constant 0.000000e+00 : f32
    %1 = vector.broadcast %cst : f32 to vector<8x128xf32>
    %2 = arith.maximumf %0, %1 : vector<8x128xf32>
    %3 = arith.truncf %2 : vector<8x128xf32> to vector<8x128xbf16>
    %c0_1 = arith.constant 0 : index
    %c0_2 = arith.constant 0 : index
    %4 = vector.load %arg3[%c0_1, %c0_2] : memref<128x128xbf16, #tpu.memory_space<vmem>>, vector<128x128xbf16>
    %cst_3 = arith.constant dense<0.000000e+00> : vector<8x128xf32>
    %5 = tpu.matmul %3, %4, %cst_3 {dimension_numbers = #tpu.dot_dimension_numbers<[1], [0], [0], [1], [0, 0, 1, 1], [], []>} : vector<8x128xbf16>, vector<128x128xbf16>, vector<8x128xf32> -> vector<8x128xf32>
    %c0_4 = arith.constant 0 : index
    %c0_5 = arith.constant 0 : index
    %6 = vector.load %arg4[%c0_4, %c0_5] : memref<1x128xf32, #tpu.memory_space<vmem>>, vector<1x128xf32>
    %7 = vector.broadcast %6 : vector<1x128xf32> to vector<8x128xf32>
    %8 = arith.addf %5, %7 : vector<8x128xf32>
    %cst_6 = arith.constant 0.000000e+00 : f32
    %9 = vector.broadcast %cst_6 : f32 to vector<8x128xf32>
    %10 = arith.maximumf %8, %9 : vector<8x128xf32>
    %11 = arith.truncf %10 : vector<8x128xf32> to vector<8x128xbf16>
    %c0_7 = arith.constant 0 : index
    %c0_8 = arith.constant 0 : index
    %12 = vector.load %arg5[%c0_7, %c0_8] : memref<128x128xbf16, #tpu.memory_space<vmem>>, vector<128x128xbf16>
    %cst_9 = arith.constant dense<0.000000e+00> : vector<8x128xf32>
    %13 = tpu.matmul %11, %12, %cst_9 {dimension_numbers = #tpu.dot_dimension_numbers<[1], [0], [0], [1], [0, 0, 1, 1], [], []>} : vector<8x128xbf16>, vector<128x128xbf16>, vector<8x128xf32> -> vector<8x128xf32>
    %c0_10 = arith.constant 0 : index
    %c0_11 = arith.constant 0 : index
    %14 = vector.load %arg6[%c0_10, %c0_11] : memref<1x128xf32, #tpu.memory_space<vmem>>, vector<1x128xf32>
    %15 = vector.broadcast %14 : vector<1x128xf32> to vector<8x128xf32>
    %16 = arith.addf %13, %15 : vector<8x128xf32>
    %c0_12 = arith.constant 0 : index
    %c0_13 = arith.constant 0 : index
    %17 = vector.load %arg2[%c0_12, %c0_13] : memref<8x16xf32, #tpu.memory_space<vmem>>, vector<8x16xf32>
    %18 = arith.truncf %17 : vector<8x16xf32> to vector<8x16xbf16>
    %c0_14 = arith.constant 0 : index
    %c0_15 = arith.constant 0 : index
    %19 = vector.load %arg7[%c0_14, %c0_15] : memref<16x128xbf16, #tpu.memory_space<vmem>>, vector<16x128xbf16>
    %cst_16 = arith.constant dense<0.000000e+00> : vector<8x128xf32>
    %20 = tpu.matmul %18, %19, %cst_16 {dimension_numbers = #tpu.dot_dimension_numbers<[1], [0], [0], [1], [0, 0, 1, 1], [], []>} : vector<8x16xbf16>, vector<16x128xbf16>, vector<8x128xf32> -> vector<8x128xf32>
    %c0_17 = arith.constant 0 : index
    %c0_18 = arith.constant 0 : index
    %21 = vector.load %arg8[%c0_17, %c0_18] : memref<1x128xf32, #tpu.memory_space<vmem>>, vector<1x128xf32>
    %22 = vector.broadcast %21 : vector<1x128xf32> to vector<8x128xf32>
    %23 = arith.addf %20, %22 : vector<8x128xf32>
    %24 = arith.negf %23 : vector<8x128xf32>
    %25 = math.exp %24 : vector<8x128xf32>
    %cst_19 = arith.constant 1.000000e+00 : f32
    %26 = vector.broadcast %cst_19 : f32 to vector<8x128xf32>
    %27 = arith.addf %26, %25 : vector<8x128xf32>
    %28 = arith.divf %26, %27 : vector<8x128xf32>
    %29 = arith.mulf %16, %28 : vector<8x128xf32>
    %30 = arith.addf %0, %29 : vector<8x128xf32>
    %c0_20 = arith.constant 0 : index
    %c0_21 = arith.constant 0 : index
    %31 = vector.load %arg9[%c0_20, %c0_21] : memref<8x128xf32, #tpu.memory_space<vmem>>, vector<8x128xf32>
    tpu.vector_store %arg9[%c0_20, %c0_21], %30 {strides = array<i32>} : memref<8x128xf32, #tpu.memory_space<vmem>>, vector<8x128xf32>,
    return
  }
  func.func @transform_0(%arg0: i32) -> (i32, i32) {
    %c0_i32 = arith.constant 0 : i32
    %c0_i32_0 = arith.constant 0 : i32
    return %arg0, %c0_i32 : i32, i32
  }
  func.func @transform_1(%arg0: i32) -> (i32, i32) {
    %c0_i32 = arith.constant 0 : i32
    %c0_i32_0 = arith.constant 0 : i32
    return %arg0, %c0_i32 : i32, i32
  }
  func.func @transform_2(%arg0: i32) -> (i32, i32) {
    %c0_i32 = arith.constant 0 : i32
    %c0_i32_0 = arith.constant 0 : i32
    %c0_i32_1 = arith.constant 0 : i32
    return %c0_i32, %c0_i32_0 : i32, i32
  }
  func.func @transform_3(%arg0: i32) -> (i32, i32) {
    %c0_i32 = arith.constant 0 : i32
    %c0_i32_0 = arith.constant 0 : i32
    %c0_i32_1 = arith.constant 0 : i32
    return %c0_i32, %c0_i32_0 : i32, i32
  }
  func.func @transform_4(%arg0: i32) -> (i32, i32) {
    %c0_i32 = arith.constant 0 : i32
    %c0_i32_0 = arith.constant 0 : i32
    %c0_i32_1 = arith.constant 0 : i32
    return %c0_i32, %c0_i32_0 : i32, i32
  }
  func.func @transform_5(%arg0: i32) -> (i32, i32) {
    %c0_i32 = arith.constant 0 : i32
    %c0_i32_0 = arith.constant 0 : i32
    %c0_i32_1 = arith.constant 0 : i32
    return %c0_i32, %c0_i32_0 : i32, i32
  }
  func.func @transform_6(%arg0: i32) -> (i32, i32) {
    %c0_i32 = arith.constant 0 : i32
    %c0_i32_0 = arith.constant 0 : i32
    %c0_i32_1 = arith.constant 0 : i32
    return %c0_i32, %c0_i32_0 : i32, i32
  }
  func.func @transform_7(%arg0: i32) -> (i32, i32) {
    %c0_i32 = arith.constant 0 : i32
    %c0_i32_0 = arith.constant 0 : i32
    %c0_i32_1 = arith.constant 0 : i32
    return %c0_i32, %c0_i32_0 : i32, i32
  }
  func.func @transform_8(%arg0: i32) -> (i32, i32) {
    %c0_i32 = arith.constant 0 : i32
    %c0_i32_0 = arith.constant 0 : i32
    return %arg0, %c0_i32 : i32, i32
  }
}

</mosaic_0001>

<llo_original>
// kernel: residual_block.1
$region0: #{residual_block.1}
  #allocation0 [shape = 'u32[]', space=smem, size = 0x4, offset = 0x4, fixed_abs, tag = 'smem constant byte address 0x4 - core index']
  #allocation1 [shape = 'u32[144,128]{1,0:T(1,128)}', space=vmem, size = 0x12000, scoped, tag = 'internal scratch']
  %s0 = inlined_call_operand.vmem [shape: f32[8,128], index: 0, kind: input, shape index: {}]
  %s1 = inlined_call_operand.vmem [shape: f32[8,16], index: 1, kind: input, shape index: {}]
  %s2 = inlined_call_operand.hbm [shape: bf16[128,128], index: 2, kind: input, shape index: {}]
  %s3 = inlined_call_operand.vmem [shape: f32[1,128], index: 3, kind: input, shape index: {}]
  %s4 = inlined_call_operand.hbm [shape: bf16[128,128], index: 4, kind: input, shape index: {}]
  %s5 = inlined_call_operand.vmem [shape: f32[1,128], index: 5, kind: input, shape index: {}]
  %s6 = inlined_call_operand.vmem [shape: bf16[16,128], index: 6, kind: input, shape index: {}]
  %s7 = inlined_call_operand.vmem [shape: f32[1,128], index: 7, kind: input, shape index: {}]
  %s8 = inlined_call_operand.hbm [shape: f32[8,128], index: 8, kind: output, shape index: {}]
  %s9 = sld [smem:[#allocation0]]
  $region50: #{residual_block.1} parent=0
    _
  %s11 = ssub.s32 1, %s9
  %s12 = scalar_select 0, %s11, %s9
  $region1: #{residual_block.1} parent=0
    #allocation2 [shape = 'u8[32768]{0}', space=vmem, size = 0x8000, scoped, tag = 'input window, operand 2, single buffered']
    #allocation3 [shape = 's32[1]{0}', space=sflag, size = 0x4, scoped, tag = 'scoped memory for residual_block.1']
    #allocation4 [shape = 's32[1]{0}', space=sflag, size = 0x4, scoped, tag = 'scoped memory for residual_block.1']
    #allocation5 [shape = 'u8[32768]{0}', space=vmem, size = 0x8000, scoped, tag = 'input window, operand 4, single buffered']
    #allocation6 [shape = 's32[1]{0}', space=sflag, size = 0x4, scoped, tag = 'scoped memory for residual_block.1']
    #allocation7 [shape = 'u8[4096]{0}', space=vmem, size = 0x1000, scoped, tag = 'output window, operand 0, single buffered']
    %13 = vsyncpa [#allocation3], 0
    %14 = vsyncpa [#allocation6], 0
    %15 = vsyncpa [#allocation4], 0
    // Predicated region
    $region2: #{residual_block.1} parent=1 // pred_check
      _
    $region3: #{residual_block.1} parent=1 // pred_check_branch
      %17 = sbr.rel (0) target = $region5
    $region4: #{residual_block.1} parent=1 // pred_region
      _
    $region5: #{residual_block.1} parent=1 // pred_fallthru
      _
    // Predicated region
    $region6: #{residual_block.1} parent=1 // pred_check
      _
    $region7: #{residual_block.1} parent=1 // pred_check_branch
      %19 = sbr.rel (0) target = $region9
    $region8: #{residual_block.1} parent=1 // pred_region
      _
    $region9: #{residual_block.1} parent=1 // pred_fallthru
      _
    // Predicated region
    $region10: #{residual_block.1} parent=1 // pred_check
      _
    $region11: #{residual_block.1} parent=1 // pred_check_branch
      %21 = sbr.rel (0) target = $region13
    $region12: #{residual_block.1} parent=1 // pred_region
      %s23 = ssub.s32 1024, 1024
      %24 = vsyncadd [#allocation3], %s23
      %s25 = sshll.u32 [#allocation2], 4
      %s26 = int_to_ptr.vmem [resolvable:$true] %s25
      %31 = dma.hbm_to_vmem [thread:$0]  %s2, 1024, %s26, [#allocation3], 64, 64, 4
    $region13: #{residual_block.1} parent=1 // pred_fallthru
      _
    // Predicated region
    $region14: #{residual_block.1} parent=1 // pred_check
      _
    $region15: #{residual_block.1} parent=1 // pred_check_branch
      %33 = sbr.rel (0) target = $region17
    $region16: #{residual_block.1} parent=1 // pred_region
      _
    $region17: #{residual_block.1} parent=1 // pred_fallthru
      _
    // Predicated region
    $region18: #{residual_block.1} parent=1 // pred_check
      _
    $region19: #{residual_block.1} parent=1 // pred_check_branch
      %35 = sbr.rel (0) target = $region21
    $region20: #{residual_block.1} parent=1 // pred_region
      %s37 = ssub.s32 1024, 1024
      %38 = vsyncadd [#allocation6], %s37
      %s39 = sshll.u32 [#allocation5], 4
      %s40 = int_to_ptr.vmem [resolvable:$true] %s39
      %45 = dma.hbm_to_vmem [thread:$0]  %s4, 1024, %s40, [#allocation6], 64, 64, 4
    $region21: #{residual_block.1} parent=1 // pred_fallthru
      _
    // Predicated region
    $region22: #{residual_block.1} parent=1 // pred_check
      _
    $region23: #{residual_block.1} parent=1 // pred_check_branch
      %47 = sbr.rel (0) target = $region25
    $region24: #{residual_block.1} parent=1 // pred_region
      _
    $region25: #{residual_block.1} parent=1 // pred_fallthru
      _
    // Predicated region
    $region26: #{residual_block.1} parent=1 // pred_check
      _
    $region27: #{residual_block.1} parent=1 // pred_check_branch
      %49 = sbr.rel (0) target = $region29
    $region28: #{residual_block.1} parent=1 // pred_region
      _
    $region29: #{residual_block.1} parent=1 // pred_fallthru
      _
    // Predicated region
    $region30: #{residual_block.1} parent=1 // pred_check
      _
    $region31: #{residual_block.1} parent=1 // pred_check_branch
      %51 = sbr.rel (0) target = $region33
    $region32: #{residual_block.1} parent=1 // pred_region
      _
    $region33: #{residual_block.1} parent=1 // pred_fallthru
      _
    // Predicated region
    $region34: #{residual_block.1} parent=1 // pred_check
      _
    $region35: #{residual_block.1} parent=1 // pred_check_branch
      %53 = sbr.rel (0) target = $region37
    $region36: #{residual_block.1} parent=1 // pred_region
      %54 = dma.done [#allocation3], 1024
    $region37: #{residual_block.1} parent=1 // pred_fallthru
      _
    // Predicated region
    $region38: #{residual_block.1} parent=1 // pred_check
      _
    $region39: #{residual_block.1} parent=1 // pred_check_branch
      %56 = sbr.rel (0) target = $region41
    $region40: #{residual_block.1} parent=1 // pred_region
      %57 = dma.done [#allocation6], 1024
    $region41: #{residual_block.1} parent=1 // pred_fallthru
      _
    %v59 = vld [vmem:[%s0] sm:$0xff]
    %v60 = vmax.f32 %v59, 0.0
    %v61 = vpack.c.bf16 %v60, %v60
    %v62 = vld [vmem:[#allocation2] sm:$0xf]
    %v63 = vld [vmem:[#allocation2 + $0x4] sm:$0xf]
    %v64 = vld [vmem:[#allocation2 + $0x8] sm:$0xf]
    %v65 = vld [vmem:[#allocation2 + $0xc] sm:$0xf]
    %v66 = vld [vmem:[#allocation2 + $0x10] sm:$0xf]
    %v67 = vld [vmem:[#allocation2 + $0x14] sm:$0xf]
    %v68 = vld [vmem:[#allocation2 + $0x18] sm:$0xf]
    %v69 = vld [vmem:[#allocation2 + $0x1c] sm:$0xf]
    %v70 = vld [vmem:[#allocation2 + $0x20] sm:$0xf]
    %v71 = vld [vmem:[#allocation2 + $0x24] sm:$0xf]
    %v72 = vld [vmem:[#allocation2 + $0x28] sm:$0xf]
    %v73 = vld [vmem:[#allocation2 + $0x2c] sm:$0xf]
    %v74 = vld [vmem:[#allocation2 + $0x30] sm:$0xf]
    %v75 = vld [vmem:[#allocation2 + $0x34] sm:$0xf]
    %v76 = vld [vmem:[#allocation2 + $0x38] sm:$0xf]
    %v77 = vld [vmem:[#allocation2 + $0x3c] sm:$0xf]
    %v78 = vld [vmem:[%s3] sm:$0x1]
    %v80 = vlaneseq
    %v81 = vshrl.u32 %v80, 7
    %v82 = vsub.s32 0, %v81
    %v83 = vrot.slane %v78, %v82
    %v101 = vunpack.c.l.b16 %v62
    %v102 = vunpack.c.l.b16 %v63
    %v103 = vunpack.c.l.b16 %v64
    %v104 = vunpack.c.l.b16 %v65
    %v105 = vunpack.c.l.b16 %v66
    %v106 = vunpack.c.l.b16 %v67
    %v107 = vunpack.c.l.b16 %v68
    %v108 = vunpack.c.l.b16 %v69
    %v109 = vunpack.c.l.b16 %v70
    %v110 = vunpack.c.l.b16 %v71
    %v111 = vunpack.c.l.b16 %v72
    %v112 = vunpack.c.l.b16 %v73
    %v113 = vunpack.c.l.b16 %v74
    %v114 = vunpack.c.l.b16 %v75
    %v115 = vunpack.c.l.b16 %v76
    %v116 = vunpack.c.l.b16 %v77
    %v117 = vpack.c.b16 %v102, %v101
    %v118 = vpack.c.b16 %v104, %v103
    %v119 = vpack.c.b16 %v106, %v105
    %v120 = vpack.c.b16 %v108, %v107
    %v121 = vpack.c.b16 %v110, %v109
    %v122 = vpack.c.b16 %v112, %v111
    %v123 = vpack.c.b16 %v114, %v113
    %v124 = vpack.c.b16 %v116, %v115
    %133 = vmatprep.subr.bf16.mxu0 0
    %134 = vmatpush1.bf16.msra.mxu0 %v124
    %135 = vmatprep.subr.bf16.mxu0 0
    %136 = vmatpush1.bf16.msra.mxu0 %v123
    %137 = vmatprep.subr.bf16.mxu0 0
    %138 = vmatpush1.bf16.msra.mxu0 %v122
    %139 = vmatprep.subr.bf16.mxu0 0
    %140 = vmatpush1.bf16.msra.mxu0 %v121
    %141 = vmatprep.subr.bf16.mxu0 0
    %142 = vmatpush1.bf16.msra.mxu0 %v120
    %143 = vmatprep.subr.bf16.mxu0 0
    %144 = vmatpush1.bf16.msra.mxu0 %v119
    %145 = vmatprep.subr.bf16.mxu0 0
    %146 = vmatpush1.bf16.msra.mxu0 %v118
    %147 = vmatprep.subr.bf16.mxu0 0
    %148 = vmatpush1.bf16.msra.mxu0 %v117
    %149 = vmatprep.subr.bf16.mxu0 0
    %150 = vmatpush2.bf16.msra.mxu0 0
    %151 = vmatprep.subr.bf16.mxu0 0
    %152 = vmatpush2.bf16.msra.mxu0 0
    %153 = vmatprep.subr.bf16.mxu0 0
    %154 = vmatpush2.bf16.msra.mxu0 0
    %155 = vmatprep.subr.bf16.mxu0 0
    %156 = vmatpush2.bf16.msra.mxu0 0
    %157 = vmatprep.subr.bf16.mxu0 0
    %158 = vmatpush2.bf16.msra.mxu0 0
    %159 = vmatprep.subr.bf16.mxu0 0
    %160 = vmatpush2.bf16.msra.mxu0 0
    %161 = vmatprep.subr.bf16.mxu0 0
    %162 = vmatpush2.bf16.msra.mxu0 0
    %163 = vmatprep.subr.bf16.mxu0 0
    %164 = vmatpush2.bf16.msra.mxu0 0
    %165 = vmatprep.mubr.bf16.mxu0 0
    %166 = vmatmul.mubr.bf16.gmra.mxu0 %v61
    %v167 = vpop.f32.mrf.mxu0
    %v168 = vadd.f32 %v83, %v167
    %v169 = vpop.f32.mrf.mxu0
    %v170 = vpop.f32.mrf.mxu0
    %v171 = vpop.f32.mrf.mxu0
    %172 = vdwg.mxu0
    %v173 = vmax.f32 %v168, 0.0
    %v174 = vpack.c.bf16 %v173, %v173
    %v175 = vld [vmem:[#allocation5] sm:$0xf]
    %v176 = vld [vmem:[#allocation5 + $0x4] sm:$0xf]
    %v177 = vld [vmem:[#allocation5 + $0x8] sm:$0xf]
    %v178 = vld [vmem:[#allocation5 + $0xc] sm:$0xf]
    %v179 = vld [vmem:[#allocation5 + $0x10] sm:$0xf]
    %v180 = vld [vmem:[#allocation5 + $0x14] sm:$0xf]
    %v181 = vld [vmem:[#allocation5 + $0x18] sm:$0xf]
    %v182 = vld [vmem:[#allocation5 + $0x1c] sm:$0xf]
    %v183 = vld [vmem:[#allocation5 + $0x20] sm:$0xf]
    %v184 = vld [vmem:[#allocation5 + $0x24] sm:$0xf]
    %v185 = vld [vmem:[#allocation5 + $0x28] sm:$0xf]
    %v186 = vld [vmem:[#allocation5 + $0x2c] sm:$0xf]
    %v187 = vld [vmem:[#allocation5 + $0x30] sm:$0xf]
    %v188 = vld [vmem:[#allocation5 + $0x34] sm:$0xf]
    %v189 = vld [vmem:[#allocation5 + $0x38] sm:$0xf]
    %v190 = vld [vmem:[#allocation5 + $0x3c] sm:$0xf]
    %v191 = vld [vmem:[%s5] sm:$0x1]
    %v193 = vlaneseq
    %v194 = vshrl.u32 %v193, 7
    %v195 = vsub.s32 0, %v194
    %v196 = vrot.slane %v191, %v195
    %v214 = vunpack.c.l.b16 %v175
    %v215 = vunpack.c.l.b16 %v176
    %v216 = vunpack.c.l.b16 %v177
    %v217 = vunpack.c.l.b16 %v178
    %v218 = vunpack.c.l.b16 %v179
    %v219 = vunpack.c.l.b16 %v180
    %v220 = vunpack.c.l.b16 %v181
    %v221 = vunpack.c.l.b16 %v182
    %v222 = vunpack.c.l.b16 %v183
    %v223 = vunpack.c.l.b16 %v184
    %v224 = vunpack.c.l.b16 %v185
    %v225 = vunpack.c.l.b16 %v186
    %v226 = vunpack.c.l.b16 %v187
    %v227 = vunpack.c.l.b16 %v188
    %v228 = vunpack.c.l.b16 %v189
    %v229 = vunpack.c.l.b16 %v190
    %v230 = vpack.c.b16 %v215, %v214
    %v231 = vpack.c.b16 %v217, %v216
    %v232 = vpack.c.b16 %v219, %v218
    %v233 = vpack.c.b16 %v221, %v220
    %v234 = vpack.c.b16 %v223, %v222
    %v235 = vpack.c.b16 %v225, %v224
    %v236 = vpack.c.b16 %v227, %v226
    %v237 = vpack.c.b16 %v229, %v228
    %246 = vmatprep.subr.bf16.mxu0 0
    %247 = vmatpush1.bf16.msra.mxu0 %v237
    %248 = vmatprep.subr.bf16.mxu0 0
    %249 = vmatpush1.bf16.msra.mxu0 %v236
    %250 = vmatprep.subr.bf16.mxu0 0
    %251 = vmatpush1.bf16.msra.mxu0 %v235
    %252 = vmatprep.subr.bf16.mxu0 0
    %253 = vmatpush1.bf16.msra.mxu0 %v234
    %254 = vmatprep.subr.bf16.mxu0 0
    %255 = vmatpush1.bf16.msra.mxu0 %v233
    %256 = vmatprep.subr.bf16.mxu0 0
    %257 = vmatpush1.bf16.msra.mxu0 %v232
    %258 = vmatprep.subr.bf16.mxu0 0
    %259 = vmatpush1.bf16.msra.mxu0 %v231
    %260 = vmatprep.subr.bf16.mxu0 0
    %261 = vmatpush1.bf16.msra.mxu0 %v230
    %262 = vmatprep.subr.bf16.mxu0 0
    %263 = vmatpush2.bf16.msra.mxu0 0
    %264 = vmatprep.subr.bf16.mxu0 0
    %265 = vmatpush2.bf16.msra.mxu0 0
    %266 = vmatprep.subr.bf16.mxu0 0
    %267 = vmatpush2.bf16.msra.mxu0 0
    %268 = vmatprep.subr.bf16.mxu0 0
    %269 = vmatpush2.bf16.msra.mxu0 0
    %270 = vmatprep.subr.bf16.mxu0 0
    %271 = vmatpush2.bf16.msra.mxu0 0
    %272 = vmatprep.subr.bf16.mxu0 0
    %273 = vmatpush2.bf16.msra.mxu0 0
    %274 = vmatprep.subr.bf16.mxu0 0
    %275 = vmatpush2.bf16.msra.mxu0 0
    %276 = vmatprep.subr.bf16.mxu0 0
    %277 = vmatpush2.bf16.msra.mxu0 0
    %278 = vmatprep.mubr.bf16.mxu0 0
    %279 = vmatmul.mubr.bf16.gmra.mxu0 %v174
    %v280 = vpop.f32.mrf.mxu0
    %v281 = vadd.f32 %v196, %v280
    %v282 = vpop.f32.mrf.mxu0
    %v283 = vpop.f32.mrf.mxu0
    %v284 = vpop.f32.mrf.mxu0
    %285 = vdwg.mxu0
    %v286 = vld [vmem:[%s1] sm:$0xff]
    %v287 = vpack.c.bf16 %v286, %v286
    %v288 = vld [vmem:[%s6] sm:$0xf]
    %v289 = vld [vmem:[%s6 + $0x4] sm:$0xf]
    %v290 = vld [vmem:[%s7] sm:$0x1]
    %v292 = vlaneseq
    %v293 = vshrl.u32 %v292, 7
    %v294 = vsub.s32 0, %v293
    %v295 = vrot.slane %v290, %v294
    %v299 = vunpack.c.l.b16 %v288
    %v300 = vunpack.c.l.b16 %v289
    %v301 = vpack.c.b16 %v300, %v299
    %vm303 = vcmask 130048
    %v305 = vsel %vm303, %v287, 0
    %307 = vmatprep.subr.bf16.mxu0 0
    %308 = vmatpush1.bf16.msra.mxu0 0
    %309 = vmatprep.subr.bf16.mxu0 0
    %310 = vmatpush1.bf16.msra.mxu0 0
    %311 = vmatprep.subr.bf16.mxu0 0
    %312 = vmatpush1.bf16.msra.mxu0 0
    %313 = vmatprep.subr.bf16.mxu0 0
    %314 = vmatpush1.bf16.msra.mxu0 0
    %315 = vmatprep.subr.bf16.mxu0 0
    %316 = vmatpush1.bf16.msra.mxu0 0
    %317 = vmatprep.subr.bf16.mxu0 0
    %318 = vmatpush1.bf16.msra.mxu0 0
    %319 = vmatprep.subr.bf16.mxu0 0
    %320 = vmatpush1.bf16.msra.mxu0 0
    %321 = vmatprep.subr.bf16.mxu0 0
    %322 = vmatpush1.bf16.msra.mxu0 %v301
    %323 = vmatprep.subr.bf16.mxu0 0
    %324 = vmatpush2.bf16.msra.mxu0 0
    %325 = vmatprep.subr.bf16.mxu0 0
    %326 = vmatpush2.bf16.msra.mxu0 0
    %327 = vmatprep.subr.bf16.mxu0 0
    %328 = vmatpush2.bf16.msra.mxu0 0
    %329 = vmatprep.subr.bf16.mxu0 0
    %330 = vmatpush2.bf16.msra.mxu0 0
    %331 = vmatprep.subr.bf16.mxu0 0
    %332 = vmatpush2.bf16.msra.mxu0 0
    %333 = vmatprep.subr.bf16.mxu0 0
    %334 = vmatpush2.bf16.msra.mxu0 0
    %335 = vmatprep.subr.bf16.mxu0 0
    %336 = vmatpush2.bf16.msra.mxu0 0
    %337 = vmatprep.subr.bf16.mxu0 0
    %338 = vmatpush2.bf16.msra.mxu0 0
    %339 = vmatprep.mubr.bf16.mxu0 0
    %340 = vmatmul.mubr.bf16.gmra.mxu0 %v305
    %v341 = vpop.f32.mrf.mxu0
    %v342 = vadd.f32 %v295, %v341
    %v343 = vpop.f32.mrf.mxu0
    %v344 = vpop.f32.mrf.mxu0
    %v345 = vpop.f32.mrf.mxu0
    %346 = vdwg.mxu0
    %v347 = vxor.u32 %v342, 2147483648
    %v348 = vmul.f32 %v347, 1.442695
    %v349 = vpow.pop %v348
    %v350 = vadd.f32 %v349, 1.0
    %v351 = vrcp.pop %v350
    %v352 = vmul.f32 1.0, %v351
    %v353 = vmul.f32 %v281, %v352
    %v354 = vadd.f32 %v59, %v353
    %355 = vst [vmem:[#allocation7] sm:$0xff] %v354
    // Predicated region
    $region42: #{residual_block.1} parent=1 // pred_check
      _
    $region43: #{residual_block.1} parent=1 // pred_check_branch
      %357 = sbr.rel (0) target = $region45
    $region44: #{residual_block.1} parent=1 // pred_region
      %s359 = ssub.s32 128, 128
      %360 = vsyncadd [#allocation4], %s359
      %s362 = sshll.u32 [#allocation7], 4
      %s363 = int_to_ptr.vmem [resolvable:$true] %s362
      %365 = dma.vmem_to_hbm [thread:$0]  %s363, 128, %s8, [#allocation4]
    $region45: #{residual_block.1} parent=1 // pred_fallthru
      _
    // Predicated region
    $region46: #{residual_block.1} parent=1 // pred_check
      _
    $region47: #{residual_block.1} parent=1 // pred_check_branch
      %367 = sbr.rel (0) target = $region49
    $region48: #{residual_block.1} parent=1 // pred_region
      %368 = dma.done [#allocation4], 128
    $region49: #{residual_block.1} parent=1 // pred_fallthru
      _
    %369 = vsyncpa [#allocation3], 1
    %370 = vsyncpa [#allocation6], 1
    %371 = vsyncpa [#allocation4], 1

</llo_original>
